<compile_context>
chip_gen: v5e
topology: v5e:2x2
jax: 0.10.0
libtpu: 0.0.40
codegen_flags: <defaults>
</compile_context>

<pallas_src>
import functools
import math

import jax
import jax.numpy as jnp
from jax import lax
from jax.experimental import pallas as pl
from jax.experimental.pallas import tpu as pltpu


def _ntxent_kernel(xe_ref, xa_ref, inv_e_ref, inv_c_ref, out_ref, rowsum_ref,
                   *, denom_sub, group_w):
    """One (row-tile, column-tile) grid step.

    Grid axis 0: tiles of the even-indexed anchor rows ("parallel").
    Grid axis 1: tiles over all (padded) B columns ("arbitrary", reduction).
    rowsum_ref (tr, group_w) accumulates the exp(z) row sums lane-group-wise.
    """
    c = pl.program_id(1)
    nc = pl.num_programs(1)

    @pl.when(c == 0)
    def _init():
        rowsum_ref[...] = jnp.zeros_like(rowsum_ref)

    xe = xe_ref[...]                     # (tr, D) anchor rows, input dtype
    xa = xa_ref[...]                     # (tc, D) column block, input dtype

    # Gram tile on the MXU: contract the last dims of both operands directly
    # (native transposed-RHS feed, no relayout), accumulate in f32.
    inner = lax.dot_general(
        xe, xa,
        dimension_numbers=(((1,), (1,)), ((), ())),
        preferred_element_type=jnp.float32,
    )                                    # (tr, tc) f32

    # z_ij = <x_i,x_j> * inv_i * (inv_j / T)  -- 1/T folded into inv_c, and
    # both scale vectors precomputed in the wrapper: no in-kernel norms.
    z = (inner * inv_c_ref[...]) * inv_e_ref[...]          # (tr, tc)
    e = jnp.exp(z)                                         # EUP

    # Lane-group accumulation: pure VPU adds every step; the single XLU
    # cross-lane reduce is deferred to the finalize (once per row tile).
    tc = e.shape[1]
    part = e[:, 0:group_w]
    for g in range(1, tc // group_w):
        part = part + e[:, g * group_w:(g + 1) * group_w]
    rowsum_ref[...] += part                                # (tr, group_w)

    @pl.when(c == nc - 1)
    def _finalize():
        # denom_i = sum_j exp(z_ij) - exp(1/T) - n_padded_columns
        denom = jnp.sum(rowsum_ref[...], axis=-1, keepdims=True) - denom_sub
        out_ref[...] = jnp.log(denom)                      # (tr, 1)


def _pick_tile(dim, pref, align):
    """Largest align-multiple divisor of dim that is <= pref; full dim if small."""
    if dim <= pref:
        return dim
    t = (min(pref, dim) // align) * align
    while t >= align:
        if dim % t == 0:
            return t
        t -= align
    return dim   # unreachable when dim > align has been padded to align


def ntxent_loss(paired_output: jax.Array, temperature: float = 1.0,
                *, use_bf16_matmul: bool = False) -> jax.Array:
    b, d = paired_output.shape
    assert b % 2 == 0, "batch must be even: rows (2i, 2i+1) are positive pairs"
    bh = b // 2
    inv_temp = 1.0 / float(temperature)
    # No max-subtraction before exp(): cosine logits are bounded by 1/T, which
    # must stay well below the f32 exp() overflow point (~88).
    assert inv_temp < 80.0, "temperature too small for the no-max-shift exp path"

    xf = paired_output.astype(jnp.float32)
    # Per-row inverse norms, once, in f32 (O(B*D) prework).
    inv_all = lax.rsqrt(jnp.sum(xf * xf, axis=-1))                 # (b,)

    # Positive-pair logits z[2i, 2i+1] in the wrapper (O(B*D/2)), so the
    # kernel never streams x_odd or runs a finalize-path rsqrt/reduce.
    z_pair = (jnp.sum(xf[0::2] * xf[1::2], axis=-1)
              * inv_all[0::2] * inv_all[1::2]) * inv_temp          # (bh,)

    # Kernel operands. 1/T folded into the per-column scales.
    x_cols = paired_output.astype(jnp.bfloat16) if use_bf16_matmul else paired_output
    x_even = x_cols[0::2]                                          # (bh, d)
    inv_cols = (inv_all * inv_temp)[None, :]                       # (1, b)
    inv_even = inv_all[0::2][:, None]                              # (bh, 1)

    # ---- pad the column (B) axis to a 128 multiple for awkward batch sizes.
    # Padded columns have x=0 and scale=0 -> z=0 -> exp(z)=1, corrected below.
    b_pad, n_col_pad = b, 0
    if b > 128 and b % 128:
        b_pad = ((b + 127) // 128) * 128
        n_col_pad = b_pad - b
        x_cols = jnp.concatenate(
            [x_cols, jnp.zeros((n_col_pad, d), x_cols.dtype)], axis=0)
        inv_cols = jnp.concatenate(
            [inv_cols, jnp.zeros((1, n_col_pad), inv_cols.dtype)], axis=1)

    # ---- pad the anchor-row axis to a 16 multiple (bf16 sublane pack) for
    # large batches; padded rows (x=0, scale=0) give finite values that are
    # sliced off before the final sum.
    bh_pad = bh
    if bh > 64 and bh % 16:
        bh_pad = ((bh + 15) // 16) * 16
        rpad = bh_pad - bh
        x_even = jnp.concatenate(
            [x_even, jnp.zeros((rpad, d), x_even.dtype)], axis=0)
        inv_even = jnp.concatenate(
            [inv_even, jnp.zeros((rpad, 1), inv_even.dtype)], axis=0)

    # ---- tile selection under an explicit VMEM budget:
    # double-buffered input blocks + ~3 live f32 (tr,tc) intermediates.
    # ~28 MiB keeps headroom on v7x (64 MiB/TC) while staying large on v5e/v6e.
    in_bytes = jnp.dtype(x_cols.dtype).itemsize
    budget = 28 << 20
    tc_pref = max(128, min(2048, (budget // 2) // (2 * d * in_bytes)))
    tc = _pick_tile(b_pad, tc_pref, 128)
    rem = budget - 2 * tc * d * in_bytes
    tr_pref = max(16, min(512, rem // (3 * tc * 4 + 2 * d * in_bytes)))
    if bh_pad >= 32:                      # keep >=2 row tiles for megacore sharding
        tr_pref = min(tr_pref, bh_pad // 2)
    tr = _pick_tile(bh_pad, tr_pref, 16)

    group_w = 128 if tc % 128 == 0 else tc
    grid = (bh_pad // tr, b_pad // tc)

    kernel = functools.partial(
        _ntxent_kernel,
        # Diagonal of the cosine matrix is exp(1/T); each padded column adds 1.
        denom_sub=math.exp(inv_temp) + float(n_col_pad),
        group_w=group_w,
    )

    log_denom = pl.pallas_call(
        kernel,
        out_shape=jax.ShapeDtypeStruct((bh_pad, 1), jnp.float32),
        grid_spec=pltpu.PrefetchScalarGridSpec(
            num_scalar_prefetch=0,
            grid=grid,
            in_specs=[
                pl.BlockSpec((tr, d), lambda r, c: (r, 0)),   # anchor rows
                pl.BlockSpec((tc, d), lambda r, c: (c, 0)),   # Gram columns
                pl.BlockSpec((tr, 1), lambda r, c: (r, 0)),   # row scales (1/||x||)
                pl.BlockSpec((1, tc), lambda r, c: (0, c)),   # col scales (1/(||x||T))
            ],
            out_specs=pl.BlockSpec((tr, 1), lambda r, c: (r, 0)),
            scratch_shapes=[pltpu.VMEM((tr, group_w), jnp.float32)],
        ),
        compiler_params=pltpu.CompilerParams(
            dimension_semantics=("parallel", "arbitrary"),
            vmem_limit_bytes=48 * 1024 * 1024,
        ),
    )(x_even, x_cols, inv_even, inv_cols)

    # Row loss = log(denom_i) - z_pair_i ; tiny O(B/2) reduction + scaling.
    return (jnp.sum(log_denom[:bh, 0]) - jnp.sum(z_pair)) * 2.0 / b


if __name__ == "__main__":
    key = jax.random.PRNGKey(0)
    B, D = 8, 32                          # B even: rows (2i, 2i+1) are positive pairs
    x = jax.random.normal(key, (B, D), dtype=jnp.float32)
    # Round test data to bf16-representable values so the self-check is
    # insensitive to the TPU's default f32 matmul precision (kernel MXU path
    # vs. XLA reference path); the kernel itself accepts arbitrary f32/bf16.
    x = x.astype(jnp.bfloat16).astype(jnp.float32)

    loss = jax.jit(ntxent_loss)(x)
    jax.block_until_ready(loss)

    # Pure-JAX transcription of the PyTorch forward as a sanity check.
    T = 1.0
    norm = jnp.sqrt(jnp.sum(x ** 2, axis=-1))
    norm_mat = norm[:, None] * norm[None, :]
    inner = x @ x.T
    cos = jnp.exp(inner / (norm_mat * T))
    denom = cos.sum(axis=-1) - jnp.diagonal(cos)
    loss_matrix = -jnp.log(cos / denom[:, None])
    ref = jnp.diagonal(loss_matrix, offset=1)[::2].sum() * 2.0 / B

    assert jnp.allclose(loss, ref, rtol=1e-4, atol=1e-4), (loss, ref)
    print("KERNEL_OK")
</pallas_src>

<mosaic_0001>
module attributes {stable_mosaic.version = 11 : i64} {
  func.func @_ntxent_kernel(%arg0: i32, %arg1: i32, %arg2: memref<4x32xf32, #tpu.memory_space<vmem>>, %arg3: memref<8x32xf32, #tpu.memory_space<vmem>>, %arg4: memref<4x1xf32, #tpu.memory_space<vmem>>, %arg5: memref<1x8xf32, #tpu.memory_space<vmem>>, %arg6: memref<4x1xf32, #tpu.memory_space<vmem>>, %arg7: memref<4x8xf32, #tpu.memory_space<vmem>>) attributes {dimension_semantics = [#tpu.dimension_semantics<parallel>, #tpu.dimension_semantics<arbitrary>], iteration_bounds = array<i64: 1, 1>, scalar_prefetch = 0 : i64, scratch_operands = 1 : i64, tpu.core_type = #tpu.core_type<tc>, window_params = [{transform_indices = @transform_0, window_bounds = array<i64: 4, 32>}, {transform_indices = @transform_1, window_bounds = array<i64: 8, 32>}, {transform_indices = @transform_2, window_bounds = array<i64: 4, 1>}, {transform_indices = @transform_3, window_bounds = array<i64: 1, 8>}, {transform_indices = @transform_4, window_bounds = array<i64: 4, 1>}]} {
    %c0_i32 = arith.constant 0 : i32
    %0 = arith.cmpi eq, %arg1, %c0_i32 : i32
    %1 = arith.extui %0 : i1 to i32
    %c0_i32_0 = arith.constant 0 : i32
    %2 = arith.cmpi ne, %1, %c0_i32_0 : i32
    scf.if %2 {
      %cst_14 = arith.constant 0.000000e+00 : f32
      %19 = vector.broadcast %cst_14 : f32 to vector<4x8xf32>
      %c0_15 = arith.constant 0 : index
      %c0_16 = arith.constant 0 : index
      %20 = vector.load %arg7[%c0_15, %c0_16] : memref<4x8xf32, #tpu.memory_space<vmem>>, vector<4x8xf32>
      tpu.vector_store %arg7[%c0_15, %c0_16], %19 {strides = array<i32>} : memref<4x8xf32, #tpu.memory_space<vmem>>, vector<4x8xf32>,
    } else {
    }
    %c0 = arith.constant 0 : index
    %c0_1 = arith.constant 0 : index
    %3 = vector.load %arg2[%c0, %c0_1] : memref<4x32xf32, #tpu.memory_space<vmem>>, vector<4x32xf32>
    %c0_2 = arith.constant 0 : index
    %c0_3 = arith.constant 0 : index
    %4 = vector.load %arg3[%c0_2, %c0_3] : memref<8x32xf32, #tpu.memory_space<vmem>>, vector<8x32xf32>
    %cst = arith.constant dense<0.000000e+00> : vector<4x8xf32>
    %5 = tpu.matmul %3, %4, %cst {dimension_numbers = #tpu.dot_dimension_numbers<[1], [1], [0], [0], [0, 0, 1, 0], [], []>} : vector<4x32xf32>, vector<8x32xf32>, vector<4x8xf32> -> vector<4x8xf32>
    %c0_4 = arith.constant 0 : index
    %c0_5 = arith.constant 0 : index
    %6 = vector.load %arg5[%c0_4, %c0_5] : memref<1x8xf32, #tpu.memory_space<vmem>>, vector<1x8xf32>
    %7 = vector.broadcast %6 : vector<1x8xf32> to vector<4x8xf32>
    %8 = arith.mulf %5, %7 : vector<4x8xf32>
    %c0_6 = arith.constant 0 : index
    %c0_7 = arith.constant 0 : index
    %9 = vector.load %arg4[%c0_6, %c0_7] : memref<4x1xf32, #tpu.memory_space<vmem>>, vector<4x1xf32>
    %10 = vector.broadcast %9 : vector<4x1xf32> to vector<4x8xf32>
    %11 = arith.mulf %8, %10 : vector<4x8xf32>
    %12 = math.exp %11 : vector<4x8xf32>
    %c0_8 = arith.constant 0 : index
    %c0_9 = arith.constant 0 : index
    %13 = vector.load %arg7[%c0_8, %c0_9] : memref<4x8xf32, #tpu.memory_space<vmem>>, vector<4x8xf32>
    %14 = arith.addf %13, %12 : vector<4x8xf32>
    %c0_10 = arith.constant 0 : index
    %c0_11 = arith.constant 0 : index
    %15 = vector.load %arg7[%c0_10, %c0_11] : memref<4x8xf32, #tpu.memory_space<vmem>>, vector<4x8xf32>
    tpu.vector_store %arg7[%c0_10, %c0_11], %14 {strides = array<i32>} : memref<4x8xf32, #tpu.memory_space<vmem>>, vector<4x8xf32>,
    %c0_i32_12 = arith.constant 0 : i32
    %16 = arith.cmpi eq, %arg1, %c0_i32_12 : i32
    %17 = arith.extui %16 : i1 to i32
    %c0_i32_13 = arith.constant 0 : i32
    %18 = arith.cmpi ne, %17, %c0_i32_13 : i32
    scf.if %18 {
      %c0_14 = arith.constant 0 : index
      %c0_15 = arith.constant 0 : index
      %19 = vector.load %arg7[%c0_14, %c0_15] : memref<4x8xf32, #tpu.memory_space<vmem>>, vector<4x8xf32>
      %cst_16 = arith.constant dense<0.000000e+00> : vector<4xf32>
      %20 = vector.multi_reduction <add>, %19, %cst_16 [1] : vector<4x8xf32> to vector<4xf32>
      %21 = vector.shape_cast %20 : vector<4xf32> to vector<4x1xf32>
      %cst_17 = arith.constant 2.71828175 : f32
      %22 = vector.broadcast %cst_17 : f32 to vector<4x1xf32>
      %23 = arith.subf %21, %22 : vector<4x1xf32>
      %24 = math.log %23 : vector<4x1xf32>
      %c0_18 = arith.constant 0 : index
      %c0_19 = arith.constant 0 : index
      %25 = vector.load %arg6[%c0_18, %c0_19] : memref<4x1xf32, #tpu.memory_space<vmem>>, vector<4x1xf32>
      tpu.vector_store %arg6[%c0_18, %c0_19], %24 {strides = array<i32>} : memref<4x1xf32, #tpu.memory_space<vmem>>, vector<4x1xf32>,
    } else {
    }
    return
  }
  func.func @transform_0(%arg0: i32, %arg1: i32) -> (i32, i32) {
    %c0_i32 = arith.constant 0 : i32
    %c0_i32_0 = arith.constant 0 : i32
    return %arg0, %c0_i32 : i32, i32
  }
  func.func @transform_1(%arg0: i32, %arg1: i32) -> (i32, i32) {
    %c0_i32 = arith.constant 0 : i32
    %c0_i32_0 = arith.constant 0 : i32
    return %arg1, %c0_i32 : i32, i32
  }
  func.func @transform_2(%arg0: i32, %arg1: i32) -> (i32, i32) {
    %c0_i32 = arith.constant 0 : i32
    %c0_i32_0 = arith.constant 0 : i32
    return %arg0, %c0_i32 : i32, i32
  }
  func.func @transform_3(%arg0: i32, %arg1: i32) -> (i32, i32) {
    %c0_i32 = arith.constant 0 : i32
    %c0_i32_0 = arith.constant 0 : i32
    return %c0_i32, %arg1 : i32, i32
  }
  func.func @transform_4(%arg0: i32, %arg1: i32) -> (i32, i32) {
    %c0_i32 = arith.constant 0 : i32
    %c0_i32_0 = arith.constant 0 : i32
    return %arg0, %c0_i32 : i32, i32
  }
}

</mosaic_0001>

<llo_original>
// kernel: ntxent_loss.1
$region0: #{ntxent_loss.1}
  #allocation0 [shape = 'u32[]', space=smem, size = 0x4, offset = 0x4, fixed_abs, tag = 'smem constant byte address 0x4 - core index']
  #allocation1 [shape = 'u32[72,128]{1,0:T(1,128)}', space=vmem, size = 0x9000, scoped, tag = 'internal scratch']
  #allocation2 [shape = 'f32[4,8]{1,0:T(4,128)}', space=vmem, size = 0x800, scoped, tag = 'scratch operand']
  %s0 = inlined_call_operand.vmem [shape: f32[4,32], index: 0, kind: input, shape index: {}]
  %s1 = inlined_call_operand.vmem [shape: f32[8,32], index: 1, kind: input, shape index: {}]
  %s2 = inlined_call_operand.vmem [shape: f32[4,1], index: 2, kind: input, shape index: {}]
  %s3 = inlined_call_operand.vmem [shape: f32[1,8], index: 3, kind: input, shape index: {}]
  %s4 = inlined_call_operand.vmem [shape: f32[4,1], index: 4, kind: output, shape index: {}]
  %s5 = sld [smem:[#allocation0]]
  $region34: #{ntxent_loss.1} parent=0
    _
  %s7 = ssub.s32 1, %s5
  %s8 = scalar_select 0, %s7, %s5
  // Predicated region
  $region2: #{ntxent_loss.1} parent=0 // pred_check
    _
  $region3: #{ntxent_loss.1} parent=0 // pred_check_branch
    %10 = sbr.rel (0) target = $region5
  $region4: #{ntxent_loss.1} parent=0 // pred_region
    _
  $region5: #{ntxent_loss.1} parent=0 // pred_fallthru
    _
  // Predicated region
  $region6: #{ntxent_loss.1} parent=0 // pred_check
    _
  $region7: #{ntxent_loss.1} parent=0 // pred_check_branch
    %12 = sbr.rel (0) target = $region9
  $region8: #{ntxent_loss.1} parent=0 // pred_region
    _
  $region9: #{ntxent_loss.1} parent=0 // pred_fallthru
    _
  // Predicated region
  $region10: #{ntxent_loss.1} parent=0 // pred_check
    _
  $region11: #{ntxent_loss.1} parent=0 // pred_check_branch
    %14 = sbr.rel (0) target = $region13
  $region12: #{ntxent_loss.1} parent=0 // pred_region
    _
  $region13: #{ntxent_loss.1} parent=0 // pred_fallthru
    _
  // Predicated region
  $region14: #{ntxent_loss.1} parent=0 // pred_check
    _
  $region15: #{ntxent_loss.1} parent=0 // pred_check_branch
    %16 = sbr.rel (0) target = $region17
  $region16: #{ntxent_loss.1} parent=0 // pred_region
    _
  $region17: #{ntxent_loss.1} parent=0 // pred_fallthru
    _
  %p17 = scmp.eq.s32.totalorder 0, 0
  // Predicated region
  $region18: #{ntxent_loss.1} parent=0 // pred_check
    %p18 = pneg %p17
  $region19: #{ntxent_loss.1} parent=0 // pred_check_branch
    %20 = sbr.rel (%p18) target = $region21
  $region20: #{ntxent_loss.1} parent=0 // pred_region
    %vm21 = vcmask 60416
    %22 = vst.msk [vmem:[#allocation2] sm:$0xf] %vm21, 0.0
  $region21: #{ntxent_loss.1} parent=0 // pred_fallthru
    _
  %v23 = vld [vmem:[%s0] sm:$0xf]
  %v24 = vld [vmem:[%s1] sm:$0xff]
  %vm25 = vcmask 261120
  %v27 = vsel %vm25, %v23, 0
  %v30 = vsel %vm25, %v24, 0
  %32 = vmatpush.xpose.msra.mxu0 0.0
  %33 = vmatpush.xpose.msra.mxu0 0.0
  %34 = vmatpush.xpose.msra.mxu0 0.0
  %35 = vmatpush.xpose.msra.mxu0 0.0
  %36 = vmatpush.xpose.msra.mxu0 0.0
  %37 = vmatpush.xpose.msra.mxu0 0.0
  %38 = vmatpush.xpose.msra.mxu0 0.0
  %39 = vmatpush.xpose.msra.mxu0 0.0
  %40 = vmatpush.xpose.msra.mxu0 0.0
  %41 = vmatpush.xpose.msra.mxu0 0.0
  %42 = vmatpush.xpose.msra.mxu0 0.0
  %43 = vmatpush.xpose.msra.mxu0 0.0
  %44 = vmatpush.xpose.msra.mxu0 0.0
  %45 = vmatpush.xpose.msra.mxu0 0.0
  %46 = vmatpush.xpose.msra.mxu0 0.0
  %47 = vmatpush.xpose.msra.mxu0 %v30
  %48 = vmatmul.f32.gmra.mxu0 %v27
  %v49 = vpop.f32.mrf.mxu0
  %v50 = vadd.f32 0.0, %v49
  %51 = vdwg.mxu0
  %v52 = vld [vmem:[%s3] sm:$0x1]
  %v54 = vperm.slane %v52, 0
  %v56 = vmul.f32 %v50, %v54
  %v57 = vld [vmem:[%s2] sm:$0xf]
  %59 = vset.pattern.permute.xlu0 0
  %60 = vperm.xlu0 %59, %v57
  %v61 = vpop.permute.xlu0 %60
  %v63 = vmul.f32 %v56, %v61
  %v64 = vmul.f32 %v63, 1.442695
  %v65 = vpow.pop %v64
  %v66 = vld [vmem:[#allocation2] sm:$0xf]
  %v67 = vadd.f32 %v66, %v65
  %vm68 = vcmask 60416
  %69 = vst.msk [vmem:[#allocation2] sm:$0xf] %vm68, %v67
  // Predicated region
  $region22: #{ntxent_loss.1} parent=0 // pred_check
    %p70 = pneg %p17
  $region23: #{ntxent_loss.1} parent=0 // pred_check_branch
    %72 = sbr.rel (%p70) target = $region25
  $region24: #{ntxent_loss.1} parent=0 // pred_region
    %v73 = vld [vmem:[#allocation2] sm:$0xf]
    %v74 = vsel %vm68, %v73, 0.0
    %75 = vadd.xlane.f32.xlu0 %v74
    %v76 = vpop.xlane.xlu0 %75
    %v77 = vsub.f32 %v76, 2.7182817
    %v78 = vlog2.pop %v77
    %v79 = vmul.f32 %v78, 0.6931472
    %vm80 = vcmask 3072
    %81 = vst.msk [vmem:[%s4] sm:$0xf] %vm80, %v79
  $region25: #{ntxent_loss.1} parent=0 // pred_fallthru
    _
  // Predicated region
  $region26: #{ntxent_loss.1} parent=0 // pred_check
    _
  $region27: #{ntxent_loss.1} parent=0 // pred_check_branch
    %83 = sbr.rel (0) target = $region29
  $region28: #{ntxent_loss.1} parent=0 // pred_region
    _
  $region29: #{ntxent_loss.1} parent=0 // pred_fallthru
    _
  // Predicated region
  $region30: #{ntxent_loss.1} parent=0 // pred_check
    _
  $region31: #{ntxent_loss.1} parent=0 // pred_check_branch
    %85 = sbr.rel (0) target = $region33
  $region32: #{ntxent_loss.1} parent=0 // pred_region
    _
  $region33: #{ntxent_loss.1} parent=0 // pred_fallthru
    _

</llo_original>
